<compile_context>
chip_gen: v7x
topology: tpu7x:2x2x1
jax: 0.10.0
libtpu: 0.0.40
codegen_flags: <defaults>
</compile_context>

<pallas_src>
import functools
import math

import jax
import jax.numpy as jnp
import numpy as np
from jax.experimental import pallas as pl
from jax.experimental.pallas import tpu as pltpu

BN_EPS = 1e-5  # nn.BatchNorm2d default eps


def _round_up(x, m):
    return ((x + m - 1) // m) * m


def _vmem_bytes(rows, cols, itemsize):
    # VMEM arrays live in (8, 128) tiles -> account for sublane/lane padding.
    return _round_up(max(rows, 1), 8) * _round_up(max(cols, 1), 128) * itemsize


def _tpu_vmem_capacity():
    try:
        info = pltpu.get_tpu_info()
        cap = int(getattr(info, "vmem_capacity_bytes", 0) or 0)
        if cap > 0:
            return cap
    except Exception:
        pass
    return 128 * 1024 * 1024


def _budgets():
    """(scoped vmem limit, fused-path budget, streaming budget), per TensorCore."""
    phys = _tpu_vmem_capacity()
    if phys <= 64 * 1024 * 1024:              # v7x-class parts: 64 MiB / TC
        return 40 << 20, 28 << 20, 14 << 20
    return 96 << 20, 72 << 20, 28 << 20       # v5e / v6e: 128 MiB


def _pack_group(K, Cout):
    """Smallest g such that (g*K) % 128 == 0 and (g*Cout) % 128 == 0."""
    a = 128 // math.gcd(K, 128)
    b = 128 // math.gcd(Cout, 128)
    return a * b // math.gcd(a, b)


def _choose_tr(R, Kp, Coutp, p_itemsize, const_bytes, budget, tr_max=1024):
    if R <= 8:
        return R                               # single block equal to the full (row) extent
    tr = min(_round_up(tr_max, 8), (R // 8) * 8)
    while tr > 8:
        ws = (const_bytes
              + 2 * _vmem_bytes(tr, Kp, p_itemsize)     # streamed patches (double-buffered)
              + 2 * _vmem_bytes(tr, Coutp, 4))          # f32 output tile (double-buffered)
        if ws <= budget:
            break
        tr = max(8, _round_up(tr // 2, 8))
    return tr


# ---------------------------------------------------------------------------
# Fused fast path: grid = (phase, row tile).
#   phase 0: conv + bias + batch stats; y kept in a bf16 VMEM scratch.
#   phase 1: BN affine + ReLU written as f32 straight from the VMEM-resident y.
# ---------------------------------------------------------------------------
def _fused_kernel(p_ref, w_ref, prm_ref, fold_ref, o_ref,
                  y_scr, sum_scr, sq_scr, scale_scr, shift_scr,
                  *, tr, rows_valid, nt, ragged, inv_count):
    phase = pl.program_id(0)
    i = pl.program_id(1)

    @pl.when(phase == 0)
    def _conv_and_stats():
        @pl.when(i == 0)
        def _init():
            sum_scr[...] = jnp.zeros_like(sum_scr)
            sq_scr[...] = jnp.zeros_like(sq_scr)
            # The output buffer is parked on block 0 for the whole of phase 0 and only written in
            # phase 1; zero it once so nothing uninitialized could ever reach HBM even if the
            # write-back-on-block-change behaviour changes.
            o_ref[...] = jnp.zeros_like(o_ref)

        y = jnp.dot(p_ref[...].astype(jnp.bfloat16), w_ref[...],
                    preferred_element_type=jnp.float32)
        y = y + prm_ref[0:1, :]                     # conv bias (already group-tiled)
        y_scr[i] = y.astype(jnp.bfloat16)

        def _acc(yv):
            sum_scr[...] += jnp.sum(yv, axis=0, keepdims=True)
            sq_scr[...] += jnp.sum(yv * yv, axis=0, keepdims=True)

        if ragged:                                  # static: only the last tile needs masking
            @pl.when(i < nt - 1)
            def _():
                _acc(y)

            @pl.when(i == nt - 1)
            def _():
                row = i * tr + jax.lax.broadcasted_iota(jnp.int32, (tr, 1), 0)
                _acc(jnp.where(row < rows_valid, y, 0.0))
        else:
            _acc(y)

        @pl.when(i == nt - 1)
        def _fold_bn_affine():
            stats = jnp.concatenate([sum_scr[...], sq_scr[...]], axis=0)      # (2, Coutp)
            # fold_ref is a 0/1 matrix that sums the g per-group lanes of each channel and
            # re-tiles the totals, so `folded` holds the per-channel totals laid out per lane.
            folded = jnp.dot(stats, fold_ref[...], preferred_element_type=jnp.float32)
            mean = folded[0:1, :] * inv_count
            var = jnp.maximum(folded[1:2, :] * inv_count - mean * mean, 0.0)  # clamp: no NaN rsqrt
            scale = prm_ref[1:2, :] * jax.lax.rsqrt(var + BN_EPS)
            scale_scr[...] = scale
            shift_scr[...] = prm_ref[2:3, :] - mean * scale

    @pl.when(phase == 1)
    def _bn_relu():
        y = y_scr[i].astype(jnp.float32)
        o_ref[...] = jnp.maximum(y * scale_scr[...] + shift_scr[...], 0.0).astype(o_ref.dtype)


# ---------------------------------------------------------------------------
# Fallback (large M): two calls. Kernel A emits per-tile partial stats so its grid axis can be
# "parallel" (megacore); kernel B is a folded affine + ReLU writing the final f32 directly.
# ---------------------------------------------------------------------------
def _conv_stats_kernel(p_ref, w_ref, prm_ref, y_ref, pstats_ref, *, tr, rows_valid, nt, ragged):
    i = pl.program_id(0)
    y = jnp.dot(p_ref[...].astype(jnp.bfloat16), w_ref[...], preferred_element_type=jnp.float32)
    y = y + prm_ref[0:1, :]
    y_ref[...] = y.astype(y_ref.dtype)

    def _emit(yv):
        s = jnp.sum(yv, axis=0, keepdims=True)
        q = jnp.sum(yv * yv, axis=0, keepdims=True)
        pstats_ref[...] = jnp.concatenate([s, q], axis=0)[None]

    if ragged:
        @pl.when(i < nt - 1)
        def _():
            _emit(y)

        @pl.when(i == nt - 1)
        def _():
            row = i * tr + jax.lax.broadcasted_iota(jnp.int32, (tr, 1), 0)
            _emit(jnp.where(row < rows_valid, y, 0.0))
    else:
        _emit(y)


def _bn_relu_kernel(y_ref, ab_ref, o_ref):
    y = y_ref[...].astype(jnp.float32)
    o_ref[...] = jnp.maximum(y * ab_ref[0:1, :] + ab_ref[1:2, :], 0.0).astype(o_ref.dtype)


# ---------------------------------------------------------------------------
# Wrapper (glue): layout, lane-dense packing, pallas_call plumbing.
# ---------------------------------------------------------------------------
def conv2d_bn_relu(x, weight, bias, gamma, beta, *, kernel_size=(1, 1), stride=(1, 1),
                   padding_size=(0, 0), tr_max=1024, force_two_pass=False):
    B, D1, D2, Cin = x.shape
    kh, kw = kernel_size
    sh, sw = stride
    p0, p1 = padding_size
    Cout = weight.shape[0]
    x = x.astype(jnp.float32)

    pointwise = (kh == 1 and kw == 1 and sh == 1 and sw == 1 and p0 == 0 and p1 == 0)
    if pointwise:
        # 1x1/stride-1/no-pad: the module's permute->conv->permute collapses to a per-(b,d1,d2)
        # matmul over Cin; both the input view and the output are pure reshapes (no transpose, no
        # extra HBM pass).  Activations stay f32 and are cast to bf16 inside the kernel.
        M, K = B * D1 * D2, Cin
        patches = x.reshape(M, K)
        out_spatial = (B, D1, D2)
        needs_transpose = False
    else:
        # General conv path: NHWC view with H=D2, W=D1 (matches the module's permute(0,3,2,1)).
        # TODO(synk): stream the kh*kw taps through a K grid axis (f32 VMEM accumulator) instead
        # of materializing the kh*kw-inflated im2col array in HBM.
        x_nhwc = jnp.transpose(x, (0, 2, 1, 3))
        if p0 or p1:
            x_nhwc = jnp.pad(x_nhwc, ((0, 0), (p0, p0), (p1, p1), (0, 0)))
        Hp, Wp = x_nhwc.shape[1], x_nhwc.shape[2]
        Ho = (Hp - kh) // sh + 1
        Wo = (Wp - kw) // sw + 1
        M, K = B * Ho * Wo, kh * kw * Cin
        x_bf = x_nhwc.astype(jnp.bfloat16)
        cols = [x_bf[:, di:di + sh * Ho:sh, dj:dj + sw * Wo:sw, :]
                for di in range(kh) for dj in range(kw)]
        patches = jnp.stack(cols, axis=3).reshape(M, K)
        out_spatial = (B, Ho, Wo)
        needs_transpose = True

    # (Cout, Cin, kh, kw) -> (kh, kw, Cin, Cout) -> (K, Cout), matching the patch ordering.
    w_mat = jnp.transpose(weight, (2, 3, 1, 0)).reshape(K, Cout).astype(jnp.float32)

    # ---- lane-dense packing: group g rows so both minor dims become multiples of 128 -----------
    g = _pack_group(K, Cout)
    if g > 1 and M % g == 0 and g * K <= 1024 and g * Cout <= 1024:
        R, Kp, Coutp = M // g, g * K, g * Cout
        patches = patches.reshape(R, Kp)                       # contiguity-preserving reshape
        eye_g = jnp.eye(g, dtype=jnp.float32)
        w_big = jnp.einsum('ab,kc->akbc', eye_g, w_mat).reshape(Kp, Coutp).astype(jnp.bfloat16)
        bias_p = jnp.tile(bias.astype(jnp.float32), g)
        gamma_p = jnp.tile(gamma.astype(jnp.float32), g)
        beta_p = jnp.tile(beta.astype(jnp.float32), g)
    else:
        g, R, Kp, Coutp = 1, M, K, Cout
        w_big = w_mat.astype(jnp.bfloat16)
        bias_p = bias.astype(jnp.float32)
        gamma_p = gamma.astype(jnp.float32)
        beta_p = beta.astype(jnp.float32)
    params = jnp.stack([bias_p, gamma_p, beta_p])              # (3, Coutp) f32

    vmem_limit, fused_budget, stream_budget = _budgets()
    p_isz = patches.dtype.itemsize
    # Grid-invariant blocks (weights / params / fold matrix), counted double-buffered.
    # TODO(synk): mark these pipeline_mode=pl.Buffered(1) once single-buffered inputs are
    # universally supported; they are fetched exactly once.
    const_bytes = (2 * _vmem_bytes(Kp, Coutp, 2) + 2 * _vmem_bytes(3, Coutp, 4)
                   + 2 * _vmem_bytes(Coutp, Coutp, 4))
    tr = _choose_tr(R, Kp, Coutp, p_isz, const_bytes, stream_budget, tr_max)
    nt = pl.cdiv(R, tr)
    ragged = (nt * tr != R)

    stream_bytes = const_bytes + 2 * _vmem_bytes(tr, Kp, p_isz) + 2 * _vmem_bytes(tr, Coutp, 4)
    y_scr_bytes = nt * _vmem_bytes(tr, Coutp, 2)               # bf16 VMEM-resident y
    use_fused = (not force_two_pass) and (stream_bytes + y_scr_bytes <= fused_budget)

    if use_fused:
        lane = jnp.arange(Coutp, dtype=jnp.int32)
        fold = (lane[:, None] % Cout == lane[None, :] % Cout).astype(jnp.float32)  # (Coutp, Coutp)
        out_flat = pl.pallas_call(
            functools.partial(_fused_kernel, tr=tr, rows_valid=R, nt=nt, ragged=ragged,
                              inv_count=1.0 / float(M)),
            out_shape=jax.ShapeDtypeStruct((R, Coutp), jnp.float32),
            grid=(2, nt),
            in_specs=[
                # phase 0: tile i; phase 1: stay parked on the last block (no redundant DMA).
                pl.BlockSpec((tr, Kp), lambda p, i: ((1 - p) * i + p * (nt - 1), 0)),
                pl.BlockSpec((Kp, Coutp), lambda p, i: (0, 0)),
                pl.BlockSpec((3, Coutp), lambda p, i: (0, 0)),
                pl.BlockSpec((Coutp, Coutp), lambda p, i: (0, 0)),
            ],
            # phase 0: park on block 0 (zero-initialized, never flushed stale); phase 1: tile i.
            out_specs=pl.BlockSpec((tr, Coutp), lambda p, i: (p * i, 0)),
            scratch_shapes=[
                pltpu.VMEM((nt, tr, Coutp), jnp.bfloat16),     # VMEM-resident y (never hits HBM)
                pltpu.VMEM((1, Coutp), jnp.float32),           # per-lane sum
                pltpu.VMEM((1, Coutp), jnp.float32),           # per-lane sum of squares
                pltpu.VMEM((1, Coutp), jnp.float32),           # folded BN scale
                pltpu.VMEM((1, Coutp), jnp.float32),           # folded BN shift
            ],
            compiler_params=pltpu.CompilerParams(
                dimension_semantics=("arbitrary", "arbitrary"),
                vmem_limit_bytes=vmem_limit),
        )(patches, w_big, params, fold)
    else:
        y_flat, pstats = pl.pallas_call(
            functools.partial(_conv_stats_kernel, tr=tr, rows_valid=R, nt=nt, ragged=ragged),
            out_shape=(jax.ShapeDtypeStruct((R, Coutp), jnp.bfloat16),
                       jax.ShapeDtypeStruct((nt, 2, Coutp), jnp.float32)),
            grid=(nt,),
            in_specs=[pl.BlockSpec((tr, Kp), lambda i: (i, 0)),
                      pl.BlockSpec((Kp, Coutp), lambda i: (0, 0)),
                      pl.BlockSpec((3, Coutp), lambda i: (0, 0))],
            out_specs=(pl.BlockSpec((tr, Coutp), lambda i: (i, 0)),
                       pl.BlockSpec((1, 2, Coutp), lambda i: (i, 0, 0))),
            compiler_params=pltpu.CompilerParams(
                dimension_semantics=("parallel",),             # per-tile partial stats -> megacore
                vmem_limit_bytes=vmem_limit),
        )(patches, w_big, params)

        stats = jnp.sum(pstats, axis=0).reshape(2, g, Cout).sum(axis=1)   # fold tiles and groups
        mean = stats[0] / M
        var = jnp.maximum(stats[1] / M - mean * mean, 0.0)     # biased (training-mode) variance
        scale = gamma.astype(jnp.float32) * jax.lax.rsqrt(var + BN_EPS)
        shift = beta.astype(jnp.float32) - mean * scale
        ab = jnp.stack([jnp.tile(scale, g), jnp.tile(shift, g)])          # (2, Coutp)

        out_flat = pl.pallas_call(
            _bn_relu_kernel,
            out_shape=jax.ShapeDtypeStruct((R, Coutp), jnp.float32),
            grid=(nt,),
            in_specs=[pl.BlockSpec((tr, Coutp), lambda i: (i, 0)),
                      pl.BlockSpec((2, Coutp), lambda i: (0, 0))],
            out_specs=pl.BlockSpec((tr, Coutp), lambda i: (i, 0)),
            compiler_params=pltpu.CompilerParams(
                dimension_semantics=("parallel",),
                vmem_limit_bytes=vmem_limit),
        )(y_flat, ab)

    out = out_flat.reshape(*out_spatial, Cout)
    if needs_transpose:
        # NCHW conv output permuted (0,3,2,1) == (B, Wo, Ho, Cout) == (B, D1_out, D2_out, Cout)
        out = jnp.transpose(out, (0, 2, 1, 3))
    return out


# ---------------------------------------------------------------------------
# Deterministic parameter init (mirrors the module's __init__).
# ---------------------------------------------------------------------------
def init_conv2d_params(key, input_dims, output_dims, kernel_size=(1, 1)):
    kh, kw = kernel_size
    fan_in = input_dims * kh * kw
    fan_out = output_dims * kh * kw
    bound = math.sqrt(6.0 / (fan_in + fan_out))               # xavier_uniform_
    weight = jax.random.uniform(key, (output_dims, input_dims, kh, kw),
                                jnp.float32, -bound, bound)
    bias = jnp.zeros((output_dims,), jnp.float32)             # zeros_
    gamma = jnp.ones((output_dims,), jnp.float32)             # BatchNorm2d weight
    beta = jnp.zeros((output_dims,), jnp.float32)             # BatchNorm2d bias
    return weight, bias, gamma, beta


def _reference(x, weight, bias, gamma, beta, stride):
    x_nchw = jnp.transpose(x, (0, 3, 2, 1))
    y = jax.lax.conv_general_dilated(
        x_nchw, weight, window_strides=stride, padding="VALID",
        dimension_numbers=("NCHW", "OIHW", "NCHW"))
    y = y + bias[None, :, None, None]
    mean = jnp.mean(y, axis=(0, 2, 3), keepdims=True)
    var = jnp.mean((y - mean) ** 2, axis=(0, 2, 3), keepdims=True)
    y = (y - mean) * jax.lax.rsqrt(var + BN_EPS)
    y = y * gamma[None, :, None, None] + beta[None, :, None, None]
    return jnp.transpose(jnp.maximum(y, 0.0), (0, 3, 2, 1))


if __name__ == "__main__":
    # TODO(synk): the module's padding='SAME' branch (math.ceil on a tuple) is broken in the
    # source; as instantiated it runs the padding_size=[0,0] path (1x1 conv acting as a pointwise
    # fully-connected layer), which is what the demo exercises.
    key = jax.random.PRNGKey(0)
    k_x, k_w, k_x2 = jax.random.split(key, 3)

    B, D1, D2, Cin, Cout = 2, 16, 16, 4, 8
    x = jax.random.normal(k_x, (B, D1, D2, Cin), jnp.float32)
    weight, bias, gamma, beta = init_conv2d_params(k_w, Cin, Cout, kernel_size=(1, 1))

    fused_fn = jax.jit(functools.partial(
        conv2d_bn_relu, kernel_size=(1, 1), stride=(1, 1), padding_size=(0, 0)))
    twopass_fn = jax.jit(functools.partial(
        conv2d_bn_relu, kernel_size=(1, 1), stride=(1, 1), padding_size=(0, 0),
        force_two_pass=True))

    out_fused = jax.block_until_ready(fused_fn(x, weight, bias, gamma, beta))
    out_two = jax.block_until_ready(twopass_fn(x, weight, bias, gamma, beta))
    ref = jax.block_until_ready(_reference(x, weight, bias, gamma, beta, (1, 1)))

    assert out_fused.shape == (B, D1, D2, Cout), out_fused.shape
    assert out_fused.dtype == jnp.float32
    assert out_two.shape == (B, D1, D2, Cout), out_two.shape
    assert np.allclose(np.asarray(out_fused), np.asarray(ref), atol=5e-2, rtol=5e-2)
    assert np.allclose(np.asarray(out_two), np.asarray(ref), atol=5e-2, rtol=5e-2)

    # Ragged / multi-tile coverage: packed rows (R=10) not a multiple of the row tile (8).
    x2 = jax.random.normal(k_x2, (B, D1, 10, Cin), jnp.float32)
    out2 = jax.block_until_ready(fused_fn(x2, weight, bias, gamma, beta))
    ref2 = jax.block_until_ready(_reference(x2, weight, bias, gamma, beta, (1, 1)))
    assert out2.shape == (B, D1, 10, Cout), out2.shape
    assert np.allclose(np.asarray(out2), np.asarray(ref2), atol=5e-2, rtol=5e-2)

    print("KERNEL_OK")
</pallas_src>

<mosaic_0001>
module attributes {stable_mosaic.version = 11 : i64} {
  func.func @_fused_kernel(%arg0: i32, %arg1: i32, %arg2: memref<16x128xf32, #tpu.memory_space<vmem>>, %arg3: memref<128x256xbf16, #tpu.memory_space<vmem>>, %arg4: memref<3x256xf32, #tpu.memory_space<vmem>>, %arg5: memref<256x256xf32, #tpu.memory_space<vmem>>, %arg6: memref<16x256xf32, #tpu.memory_space<vmem>>, %arg7: memref<1x16x256xbf16, #tpu.memory_space<vmem>>, %arg8: memref<1x256xf32, #tpu.memory_space<vmem>>, %arg9: memref<1x256xf32, #tpu.memory_space<vmem>>, %arg10: memref<1x256xf32, #tpu.memory_space<vmem>>, %arg11: memref<1x256xf32, #tpu.memory_space<vmem>>) attributes {dimension_semantics = [#tpu.dimension_semantics<arbitrary>, #tpu.dimension_semantics<arbitrary>], iteration_bounds = array<i64: 2, 1>, scalar_prefetch = 0 : i64, scratch_operands = 5 : i64, tpu.core_type = #tpu.core_type<tc>, window_params = [{transform_indices = @transform_0, window_bounds = array<i64: 16, 128>}, {pipeline_mode = #tpu.pipeline_mode<synchronous>, transform_indices = @transform_1, window_bounds = array<i64: 128, 256>}, {pipeline_mode = #tpu.pipeline_mode<synchronous>, transform_indices = @transform_2, window_bounds = array<i64: 3, 256>}, {pipeline_mode = #tpu.pipeline_mode<synchronous>, transform_indices = @transform_3, window_bounds = array<i64: 256, 256>}, {transform_indices = @transform_4, window_bounds = array<i64: 16, 256>}]} {
    %c0_i32 = arith.constant 0 : i32
    %0 = arith.cmpi eq, %arg0, %c0_i32 : i32
    %1 = arith.extui %0 : i1 to i32
    %c0_i32_0 = arith.constant 0 : i32
    %2 = arith.cmpi ne, %1, %c0_i32_0 : i32
    scf.if %2 {
      %c0_i32_2 = arith.constant 0 : i32
      %6 = arith.cmpi eq, %arg1, %c0_i32_2 : i32
      %7 = arith.extui %6 : i1 to i32
      %c0_i32_3 = arith.constant 0 : i32
      %8 = arith.cmpi ne, %7, %c0_i32_3 : i32
      scf.if %8 {
        %cst_23 = arith.constant 0.000000e+00 : f32
        %35 = vector.broadcast %cst_23 : f32 to vector<1x256xf32>
        %c0_24 = arith.constant 0 : index
        %c0_25 = arith.constant 0 : index
        %36 = vector.load %arg8[%c0_24, %c0_25] : memref<1x256xf32, #tpu.memory_space<vmem>>, vector<1x256xf32>
        tpu.vector_store %arg8[%c0_24, %c0_25], %35 {strides = array<i32>} : memref<1x256xf32, #tpu.memory_space<vmem>>, vector<1x256xf32>,
        %cst_26 = arith.constant 0.000000e+00 : f32
        %37 = vector.broadcast %cst_26 : f32 to vector<1x256xf32>
        %c0_27 = arith.constant 0 : index
        %c0_28 = arith.constant 0 : index
        %38 = vector.load %arg9[%c0_27, %c0_28] : memref<1x256xf32, #tpu.memory_space<vmem>>, vector<1x256xf32>
        tpu.vector_store %arg9[%c0_27, %c0_28], %37 {strides = array<i32>} : memref<1x256xf32, #tpu.memory_space<vmem>>, vector<1x256xf32>,
        %cst_29 = arith.constant 0.000000e+00 : f32
        %39 = vector.broadcast %cst_29 : f32 to vector<16x256xf32>
        %c0_30 = arith.constant 0 : index
        %c0_31 = arith.constant 0 : index
        %40 = vector.load %arg6[%c0_30, %c0_31] : memref<16x256xf32, #tpu.memory_space<vmem>>, vector<16x256xf32>
        tpu.vector_store %arg6[%c0_30, %c0_31], %39 {strides = array<i32>} : memref<16x256xf32, #tpu.memory_space<vmem>>, vector<16x256xf32>,
      } else {
      }
      %c0 = arith.constant 0 : index
      %c0_4 = arith.constant 0 : index
      %9 = vector.load %arg2[%c0, %c0_4] : memref<16x128xf32, #tpu.memory_space<vmem>>, vector<16x128xf32>
      %10 = arith.truncf %9 : vector<16x128xf32> to vector<16x128xbf16>
      %c0_5 = arith.constant 0 : index
      %c0_6 = arith.constant 0 : index
      %11 = vector.load %arg3[%c0_5, %c0_6] : memref<128x256xbf16, #tpu.memory_space<vmem>>, vector<128x256xbf16>
      %cst = arith.constant dense<0.000000e+00> : vector<16x256xf32>
      %12 = tpu.matmul %10, %11, %cst {dimension_numbers = #tpu.dot_dimension_numbers<[1], [0], [0], [1], [0, 0, 1, 1], [], []>} : vector<16x128xbf16>, vector<128x256xbf16>, vector<16x256xf32> -> vector<16x256xf32>
      %c0_7 = arith.constant 0 : index
      %c0_8 = arith.constant 0 : index
      %13 = vector.load %arg4[%c0_7, %c0_8] : memref<3x256xf32, #tpu.memory_space<vmem>>, vector<1x256xf32>
      %14 = vector.broadcast %13 : vector<1x256xf32> to vector<16x256xf32>
      %15 = arith.addf %12, %14 : vector<16x256xf32>
      %16 = arith.truncf %15 : vector<16x256xf32> to vector<16x256xbf16>
      %17 = arith.index_cast %arg1 : i32 to index
      %c0_9 = arith.constant 0 : index
      %c0_10 = arith.constant 0 : index
      %18 = vector.load %arg7[%17, %c0_9, %c0_10] : memref<1x16x256xbf16, #tpu.memory_space<vmem>>, vector<1x16x256xbf16>
      %19 = vector.shape_cast %18 : vector<1x16x256xbf16> to vector<16x256xbf16>
      %20 = vector.shape_cast %16 : vector<16x256xbf16> to vector<1x16x256xbf16>
      tpu.vector_store %arg7[%17, %c0_9, %c0_10], %20 {strides = array<i32>} : memref<1x16x256xbf16, #tpu.memory_space<vmem>>, vector<1x16x256xbf16>,
      %c0_11 = arith.constant 0 : index
      %c0_12 = arith.constant 0 : index
      %21 = vector.load %arg8[%c0_11, %c0_12] : memref<1x256xf32, #tpu.memory_space<vmem>>, vector<1x256xf32>
      %cst_13 = arith.constant dense<0.000000e+00> : vector<256xf32>
      %22 = vector.multi_reduction <add>, %15, %cst_13 [0] : vector<16x256xf32> to vector<256xf32>
      %23 = vector.shape_cast %22 : vector<256xf32> to vector<1x256xf32>
      %24 = arith.addf %21, %23 : vector<1x256xf32>
      %c0_14 = arith.constant 0 : index
      %c0_15 = arith.constant 0 : index
      %25 = vector.load %arg8[%c0_14, %c0_15] : memref<1x256xf32, #tpu.memory_space<vmem>>, vector<1x256xf32>
      tpu.vector_store %arg8[%c0_14, %c0_15], %24 {strides = array<i32>} : memref<1x256xf32, #tpu.memory_space<vmem>>, vector<1x256xf32>,
      %c0_16 = arith.constant 0 : index
      %c0_17 = arith.constant 0 : index
      %26 = vector.load %arg9[%c0_16, %c0_17] : memref<1x256xf32, #tpu.memory_space<vmem>>, vector<1x256xf32>
      %27 = arith.mulf %15, %15 : vector<16x256xf32>
      %cst_18 = arith.constant dense<0.000000e+00> : vector<256xf32>
      %28 = vector.multi_reduction <add>, %27, %cst_18 [0] : vector<16x256xf32> to vector<256xf32>
      %29 = vector.shape_cast %28 : vector<256xf32> to vector<1x256xf32>
      %30 = arith.addf %26, %29 : vector<1x256xf32>
      %c0_19 = arith.constant 0 : index
      %c0_20 = arith.constant 0 : index
      %31 = vector.load %arg9[%c0_19, %c0_20] : memref<1x256xf32, #tpu.memory_space<vmem>>, vector<1x256xf32>
      tpu.vector_store %arg9[%c0_19, %c0_20], %30 {strides = array<i32>} : memref<1x256xf32, #tpu.memory_space<vmem>>, vector<1x256xf32>,
      %c0_i32_21 = arith.constant 0 : i32
      %32 = arith.cmpi eq, %arg1, %c0_i32_21 : i32
      %33 = arith.extui %32 : i1 to i32
      %c0_i32_22 = arith.constant 0 : i32
      %34 = arith.cmpi ne, %33, %c0_i32_22 : i32
      scf.if %34 {
        %c0_23 = arith.constant 0 : index
        %c0_24 = arith.constant 0 : index
        %35 = vector.load %arg8[%c0_23, %c0_24] : memref<1x256xf32, #tpu.memory_space<vmem>>, vector<1x256xf32>
        %c0_25 = arith.constant 0 : index
        %c0_26 = arith.constant 0 : index
        %36 = vector.load %arg9[%c0_25, %c0_26] : memref<1x256xf32, #tpu.memory_space<vmem>>, vector<1x256xf32>
        %37 = tpu.concatenate %35, %36 in 0 : vector<1x256xf32>, vector<1x256xf32> -> vector<2x256xf32>
        %c0_27 = arith.constant 0 : index
        %c0_28 = arith.constant 0 : index
        %38 = vector.load %arg5[%c0_27, %c0_28] : memref<256x256xf32, #tpu.memory_space<vmem>>, vector<256x256xf32>
        %cst_29 = arith.constant dense<0.000000e+00> : vector<2x256xf32>
        %39 = tpu.matmul %37, %38, %cst_29 {dimension_numbers = #tpu.dot_dimension_numbers<[1], [0], [0], [1], [0, 0, 1, 1], [], []>} : vector<2x256xf32>, vector<256x256xf32>, vector<2x256xf32> -> vector<2x256xf32>
        %40 = vector.extract_strided_slice %39 {offsets = [0, 0], sizes = [1, 256], strides = [1, 1]} : vector<2x256xf32> to vector<1x256xf32>
        %cst_30 = arith.constant 0.001953125 : f32
        %41 = vector.broadcast %cst_30 : f32 to vector<1x256xf32>
        %42 = arith.mulf %40, %41 : vector<1x256xf32>
        %43 = vector.extract_strided_slice %39 {offsets = [1, 0], sizes = [1, 256], strides = [1, 1]} : vector<2x256xf32> to vector<1x256xf32>
        %cst_31 = arith.constant 0.001953125 : f32
        %44 = vector.broadcast %cst_31 : f32 to vector<1x256xf32>
        %45 = arith.mulf %43, %44 : vector<1x256xf32>
        %46 = arith.mulf %42, %42 : vector<1x256xf32>
        %47 = arith.subf %45, %46 : vector<1x256xf32>
        %cst_32 = arith.constant 0.000000e+00 : f32
        %48 = vector.broadcast %cst_32 : f32 to vector<1x256xf32>
        %49 = arith.maximumf %47, %48 : vector<1x256xf32>
        %c1 = arith.constant 1 : index
        %c0_33 = arith.constant 0 : index
        %50 = vector.load %arg4[%c1, %c0_33] : memref<3x256xf32, #tpu.memory_space<vmem>>, vector<1x256xf32>
        %cst_34 = arith.constant 9.99999974E-6 : f32
        %51 = vector.broadcast %cst_34 : f32 to vector<1x256xf32>
        %52 = arith.addf %49, %51 : vector<1x256xf32>
        %53 = math.rsqrt %52 : vector<1x256xf32>
        %54 = arith.mulf %50, %53 : vector<1x256xf32>
        %c0_35 = arith.constant 0 : index
        %c0_36 = arith.constant 0 : index
        %55 = vector.load %arg10[%c0_35, %c0_36] : memref<1x256xf32, #tpu.memory_space<vmem>>, vector<1x256xf32>
        tpu.vector_store %arg10[%c0_35, %c0_36], %54 {strides = array<i32>} : memref<1x256xf32, #tpu.memory_space<vmem>>, vector<1x256xf32>,
        %c2 = arith.constant 2 : index
        %c0_37 = arith.constant 0 : index
        %56 = vector.load %arg4[%c2, %c0_37] : memref<3x256xf32, #tpu.memory_space<vmem>>, vector<1x256xf32>
        %57 = arith.mulf %42, %54 : vector<1x256xf32>
        %58 = arith.subf %56, %57 : vector<1x256xf32>
        %c0_38 = arith.constant 0 : index
        %c0_39 = arith.constant 0 : index
        %59 = vector.load %arg11[%c0_38, %c0_39] : memref<1x256xf32, #tpu.memory_space<vmem>>, vector<1x256xf32>
        tpu.vector_store %arg11[%c0_38, %c0_39], %58 {strides = array<i32>} : memref<1x256xf32, #tpu.memory_space<vmem>>, vector<1x256xf32>,
      } else {
      }
    } else {
    }
    %c1_i32 = arith.constant 1 : i32
    %3 = arith.cmpi eq, %arg0, %c1_i32 : i32
    %4 = arith.extui %3 : i1 to i32
    %c0_i32_1 = arith.constant 0 : i32
    %5 = arith.cmpi ne, %4, %c0_i32_1 : i32
    scf.if %5 {
      %6 = arith.index_cast %arg1 : i32 to index
      %c0 = arith.constant 0 : index
      %c0_2 = arith.constant 0 : index
      %7 = vector.load %arg7[%6, %c0, %c0_2] : memref<1x16x256xbf16, #tpu.memory_space<vmem>>, vector<1x16x256xbf16>
      %8 = vector.shape_cast %7 : vector<1x16x256xbf16> to vector<16x256xbf16>
      %9 = arith.extf %8 : vector<16x256xbf16> to vector<16x256xf32>
      %c0_3 = arith.constant 0 : index
      %c0_4 = arith.constant 0 : index
      %10 = vector.load %arg10[%c0_3, %c0_4] : memref<1x256xf32, #tpu.memory_space<vmem>>, vector<1x256xf32>
      %11 = vector.broadcast %10 : vector<1x256xf32> to vector<16x256xf32>
      %12 = arith.mulf %9, %11 : vector<16x256xf32>
      %c0_5 = arith.constant 0 : index
      %c0_6 = arith.constant 0 : index
      %13 = vector.load %arg11[%c0_5, %c0_6] : memref<1x256xf32, #tpu.memory_space<vmem>>, vector<1x256xf32>
      %14 = vector.broadcast %13 : vector<1x256xf32> to vector<16x256xf32>
      %15 = arith.addf %12, %14 : vector<16x256xf32>
      %cst = arith.constant 0.000000e+00 : f32
      %16 = vector.broadcast %cst : f32 to vector<16x256xf32>
      %17 = arith.maximumf %15, %16 : vector<16x256xf32>
      %c0_7 = arith.constant 0 : index
      %c0_8 = arith.constant 0 : index
      %18 = vector.load %arg6[%c0_7, %c0_8] : memref<16x256xf32, #tpu.memory_space<vmem>>, vector<16x256xf32>
      tpu.vector_store %arg6[%c0_7, %c0_8], %17 {strides = array<i32>} : memref<16x256xf32, #tpu.memory_space<vmem>>, vector<16x256xf32>,
    } else {
    }
    return
  }
  func.func @transform_0(%arg0: i32, %arg1: i32) -> (i32, i32) {
    %c1_i32 = arith.constant 1 : i32
    %0 = arith.subi %c1_i32, %arg0 : i32
    %1 = arith.muli %0, %arg1 : i32
    %c0_i32 = arith.constant 0 : i32
    %2 = arith.muli %arg0, %c0_i32 : i32
    %3 = arith.addi %1, %2 : i32
    %c0_i32_0 = arith.constant 0 : i32
    %c0_i32_1 = arith.constant 0 : i32
    return %3, %c0_i32_0 : i32, i32
  }
  func.func @transform_1(%arg0: i32, %arg1: i32) -> (i32, i32) {
    %c0_i32 = arith.constant 0 : i32
    %c0_i32_0 = arith.constant 0 : i32
    %c0_i32_1 = arith.constant 0 : i32
    return %c0_i32, %c0_i32_0 : i32, i32
  }
  func.func @transform_2(%arg0: i32, %arg1: i32) -> (i32, i32) {
    %c0_i32 = arith.constant 0 : i32
    %c0_i32_0 = arith.constant 0 : i32
    %c0_i32_1 = arith.constant 0 : i32
    return %c0_i32, %c0_i32_0 : i32, i32
  }
  func.func @transform_3(%arg0: i32, %arg1: i32) -> (i32, i32) {
    %c0_i32 = arith.constant 0 : i32
    %c0_i32_0 = arith.constant 0 : i32
    %c0_i32_1 = arith.constant 0 : i32
    return %c0_i32, %c0_i32_0 : i32, i32
  }
  func.func @transform_4(%arg0: i32, %arg1: i32) -> (i32, i32) {
    %0 = arith.muli %arg0, %arg1 : i32
    %c0_i32 = arith.constant 0 : i32
    %c0_i32_0 = arith.constant 0 : i32
    return %0, %c0_i32 : i32, i32
  }
}

</mosaic_0001>

<llo_original>
// kernel: tile.18
$region0: #{tile.18}
  #allocation0 [shape = 's32[1]{0}', space=sflag, size = 0x4, scoped, tag = 'scoped memory for tile.18']
  %s0 = inlined_call_operand.vmem [shape: f32[8], index: 0, kind: input, shape index: {}]
  %s1 = inlined_call_operand.vmem [shape: f32[32,8], index: 1, kind: output, shape index: {}]
  // Predicated region
  $region2: #{tile.18} parent=0 // pred_check
    _
  $region3: #{tile.18} parent=0 // pred_check_branch
    %3 = sbr.rel (0) target = $region5
  $region4: #{tile.18} parent=0 // pred_region
    _
  $region5: #{tile.18} parent=0 // pred_fallthru
    _
  %v4 = vld [vmem:[%s0] ss:$0 sm:$0xff]
  %5 = vst [vmem:[%s1] sm:$0xff] %v4
  %s6 = scalar_lea.vmem %s1, 8
  %7 = vst [vmem:[%s6] sm:$0xff] %v4
  %s8 = scalar_lea.vmem %s1, 16
  %9 = vst [vmem:[%s8] sm:$0xff] %v4
  %s10 = scalar_lea.vmem %s1, 24
  %11 = vst [vmem:[%s10] sm:$0xff] %v4

// kernel: tile.27
$region0: #{tile.27}
  %s0 = inlined_call_operand.vmem [shape: f32[32,8], index: 0, kind: input, shape index: {}]
  %s1 = inlined_call_operand.vmem [shape: f32[1,256], index: 1, kind: output, shape index: {}]
  $region1: #{tile.27} parent=0
    #allocation0 [shape = 'u8[8192]{0}', space=vmem, size = 0x2000, scoped, tag = 'scoped mem for output reshape']
    %s2 = smov 3
    %v3 = vld [vmem:[%s0] ss:$16 sm:%s2]
    %vm4 = vcmask 64512
    %5 = vst.msk [vmem:[#allocation0] ss:$8 sm:$0x3] %vm4, %v3
    %s6 = scalar_lea.vmem %s0, 15
    %s7 = smov 3
    %v8 = vld [vmem:[%s6] ss:$16 sm:%s7]
    %9 = vrot.lane.b32.xlu0 %v8, 120
    %v10 = vpop.permute.xlu0 %9
    %vm11 = vcmask 1048512
    %12 = vst.msk [vmem:[#allocation0] ss:$8 sm:$0x3] %vm11, %v10
    %s13 = scalar_lea.vmem %s0, 14
    %s14 = smov 3
    %v15 = vld [vmem:[%s13] ss:$16 sm:%s14]
    %16 = vrot.lane.b32.xlu0 %v15, 112
    %v17 = vpop.permute.xlu0 %16
    %vm18 = vcmask 982912
    %19 = vst.msk [vmem:[#allocation0] ss:$8 sm:$0x3] %vm18, %v17
    %s20 = scalar_lea.vmem %s0, 13
    %s21 = smov 3
    %v22 = vld [vmem:[%s20] ss:$16 sm:%s21]
    %23 = vrot.lane.b32.xlu0 %v22, 104
    %v24 = vpop.permute.xlu0 %23
    %vm25 = vcmask 917312
    %26 = vst.msk [vmem:[#allocation0] ss:$8 sm:$0x3] %vm25, %v24
    %s27 = scalar_lea.vmem %s0, 12
    %s28 = smov 3
    %v29 = vld [vmem:[%s27] ss:$16 sm:%s28]
    %30 = vrot.lane.b32.xlu0 %v29, 96
    %v31 = vpop.permute.xlu0 %30
    %vm32 = vcmask 851712
    %33 = vst.msk [vmem:[#allocation0] ss:$8 sm:$0x3] %vm32, %v31
    %s34 = scalar_lea.vmem %s0, 11
    %s35 = smov 3
    %v36 = vld [vmem:[%s34] ss:$16 sm:%s35]
    %37 = vrot.lane.b32.xlu0 %v36, 88
    %v38 = vpop.permute.xlu0 %37
    %vm39 = vcmask 786112
    %40 = vst.msk [vmem:[#allocation0] ss:$8 sm:$0x3] %vm39, %v38
    %s41 = scalar_lea.vmem %s0, 10
    %s42 = smov 3
    %v43 = vld [vmem:[%s41] ss:$16 sm:%s42]
    %44 = vrot.lane.b32.xlu0 %v43, 80
    %v45 = vpop.permute.xlu0 %44
    %vm46 = vcmask 720512
    %47 = vst.msk [vmem:[#allocation0] ss:$8 sm:$0x3] %vm46, %v45
    %s48 = scalar_lea.vmem %s0, 9
    %s49 = smov 3
    %v50 = vld [vmem:[%s48] ss:$16 sm:%s49]
    %51 = vrot.lane.b32.xlu0 %v50, 72
    %v52 = vpop.permute.xlu0 %51
    %vm53 = vcmask 654912
    %54 = vst.msk [vmem:[#allocation0] ss:$8 sm:$0x3] %vm53, %v52
    %s55 = scalar_lea.vmem %s0, 8
    %s56 = smov 3
    %v57 = vld [vmem:[%s55] ss:$16 sm:%s56]
    %58 = vrot.lane.b32.xlu0 %v57, 64
    %v59 = vpop.permute.xlu0 %58
    %vm60 = vcmask 589312
    %61 = vst.msk [vmem:[#allocation0] ss:$8 sm:$0x3] %vm60, %v59
    %s62 = scalar_lea.vmem %s0, 7
    %s63 = smov 3
    %v64 = vld [vmem:[%s62] ss:$16 sm:%s63]
    %65 = vrot.lane.b32.xlu0 %v64, 56
    %v66 = vpop.permute.xlu0 %65
    %vm67 = vcmask 523712
    %68 = vst.msk [vmem:[#allocation0] ss:$8 sm:$0x3] %vm67, %v66
    %s69 = scalar_lea.vmem %s0, 6
    %s70 = smov 3
    %v71 = vld [vmem:[%s69] ss:$16 sm:%s70]
    %72 = vrot.lane.b32.xlu0 %v71, 48
    %v73 = vpop.permute.xlu0 %72
    %vm74 = vcmask 458112
    %75 = vst.msk [vmem:[#allocation0] ss:$8 sm:$0x3] %vm74, %v73
    %s76 = scalar_lea.vmem %s0, 5
    %s77 = smov 3
    %v78 = vld [vmem:[%s76] ss:$16 sm:%s77]
    %79 = vrot.lane.b32.xlu0 %v78, 40
    %v80 = vpop.permute.xlu0 %79
    %vm81 = vcmask 392512
    %82 = vst.msk [vmem:[#allocation0] ss:$8 sm:$0x3] %vm81, %v80
    %s83 = scalar_lea.vmem %s0, 4
    %s84 = smov 3
    %v85 = vld [vmem:[%s83] ss:$16 sm:%s84]
    %86 = vrot.lane.b32.xlu0 %v85, 32
    %v87 = vpop.permute.xlu0 %86
    %vm88 = vcmask 326912
    %89 = vst.msk [vmem:[#allocation0] ss:$8 sm:$0x3] %vm88, %v87
    %s90 = scalar_lea.vmem %s0, 3
    %s91 = smov 3
    %v92 = vld [vmem:[%s90] ss:$16 sm:%s91]
    %93 = vrot.lane.b32.xlu0 %v92, 24
    %v94 = vpop.permute.xlu0 %93
    %vm95 = vcmask 261312
    %96 = vst.msk [vmem:[#allocation0] ss:$8 sm:$0x3] %vm95, %v94
    %s97 = scalar_lea.vmem %s0, 2
    %s98 = smov 3
    %v99 = vld [vmem:[%s97] ss:$16 sm:%s98]
    %100 = vrot.lane.b32.xlu0 %v99, 16
    %v101 = vpop.permute.xlu0 %100
    %vm102 = vcmask 195712
    %103 = vst.msk [vmem:[#allocation0] ss:$8 sm:$0x3] %vm102, %v101
    %s104 = scalar_lea.vmem %s0, 1
    %s105 = smov 3
    %v106 = vld [vmem:[%s104] ss:$16 sm:%s105]
    %107 = vrot.lane.b32.xlu0 %v106, 8
    %v108 = vpop.permute.xlu0 %107
    %vm109 = vcmask 130112
    %110 = vst.msk [vmem:[#allocation0] ss:$8 sm:$0x3] %vm109, %v108
    %s112 = sshllo.u32 0, 1
    %v114 = vld [vmem:[#allocation0] sm:%s112]
    %s115 = sshllo.u32 0, 1
    %116 = vst [vmem:[%s1] sm:%s115] %v114
    %s117 = scalar_lea.vmem [#allocation0], 8
    %v118 = vld [vmem:[%s117] sm:%s112]
    %s119 = sshllo.u32 0, 1
    %s120 = scalar_lea.vmem %s1, 1
    %121 = vst [vmem:[%s120] sm:%s119] %v118

// kernel: conv2d_bn_relu.1
$region0: #{conv2d_bn_relu.1}
  #allocation0 [shape = 'u32[]', space=smem, size = 0x4, offset = 0x4, fixed_abs, tag = 'smem constant byte address 0x4 - core index']
  #allocation1 [shape = 'u32[144,128]{1,0:T(1,128)}', space=vmem, size = 0x12000, scoped, tag = 'internal scratch']
  #allocation2 [shape = 'bf16[1,16,256]{2,1,0:T(16,128)(2,1)}', space=vmem, size = 0x2000, scoped, tag = 'scratch operand']
  #allocation3 [shape = 'f32[1,256]{1,0:T(1,128)}', space=vmem, size = 0x400, scoped, tag = 'scratch operand']
  #allocation4 [shape = 'f32[1,256]{1,0:T(1,128)}', space=vmem, size = 0x400, scoped, tag = 'scratch operand']
  #allocation5 [shape = 'f32[1,256]{1,0:T(1,128)}', space=vmem, size = 0x400, scoped, tag = 'scratch operand']
  #allocation6 [shape = 'f32[1,256]{1,0:T(1,128)}', space=vmem, size = 0x400, scoped, tag = 'scratch operand']
  %s0 = inlined_call_operand.hbm [shape: f32[16,128], index: 0, kind: input, shape index: {}]
  %s1 = inlined_call_operand.hbm [shape: bf16[128,256], index: 1, kind: input, shape index: {}]
  %s2 = inlined_call_operand.hbm [shape: f32[3,256], index: 2, kind: input, shape index: {}]
  %s3 = inlined_call_operand.hbm [shape: f32[256,256], index: 3, kind: input, shape index: {}]
  %s4 = inlined_call_operand.hbm [shape: f32[16,256], index: 4, kind: output, shape index: {}]
  %s5 = sld [smem:[#allocation0]]
  $region81: #{conv2d_bn_relu.1} parent=0
    _
  %s7 = ssub.s32 1, %s5
  %s8 = scalar_select 0, %s7, %s5
  $region1: #{conv2d_bn_relu.1} parent=0
    #allocation7 [shape = 'u8[16384]{0}', space=vmem, size = 0x4000, scoped, tag = 'input window, operand 0']
    #allocation8 [shape = 's32[2]{0}', space=sflag, size = 0x8, scoped, tag = 'scoped memory for conv2d_bn_relu.1']
    #allocation9 [shape = 's32[2]{0}', space=sflag, size = 0x8, scoped, tag = 'scoped memory for conv2d_bn_relu.1']
    #allocation10 [shape = 'u8[65536]{0}', space=vmem, size = 0x10000, scoped, tag = 'input window, operand 1, single buffered']
    #allocation11 [shape = 's32[1]{0}', space=sflag, size = 0x4, scoped, tag = 'scoped memory for conv2d_bn_relu.1']
    #allocation12 [shape = 'u8[4096]{0}', space=vmem, size = 0x1000, scoped, tag = 'input window, operand 2, single buffered']
    #allocation13 [shape = 'u8[262144]{0}', space=vmem, size = 0x40000, scoped, tag = 'input window, operand 3, single buffered']
    #allocation14 [shape = 's32[1]{0}', space=sflag, size = 0x4, scoped, tag = 'scoped memory for conv2d_bn_relu.1']
    #allocation15 [shape = 'u8[32768]{0}', space=vmem, size = 0x8000, scoped, tag = 'output window, operand 0']
    %9 = vsyncpa [#allocation8], 0
    %s10 = scalar_lea.sflag [#allocation8], 1
    %11 = vsyncpa %s10, 0
    %12 = vsyncpa [#allocation11], 0
    %13 = vsyncpa [#allocation14], 0
    %14 = vsyncpa [#allocation9], 0
    %s15 = scalar_lea.sflag [#allocation9], 1
    %16 = vsyncpa %s15, 0
    loop: start=0, step=1, limit=4
    $region2: #{conv2d_bn_relu.1} parent=1 // loop_pre_header
      _
    $region3: #{conv2d_bn_relu.1} parent=1 // loop_header
      %s18 = sphi 0, %s22
      %p19 = scmp.ge.s32.totalorder %s18, 4
      %s25 = sphi 0, %s37
      %s26 = sphi 0, %s33
      %s27 = sphi 0, %s25
      %s28 = sphi 0, %s26
      %s29 = sphi 0, %s27
      %s30 = sphi 0, %s28
      %s44 = sphi 0, %s46
      %s47 = sphi 0, %s44
      %s48 = sphi 0, %s47
      %s64 = sphi 0, %s48
      %s68 = sphi 0, %s68
      %s70 = sphi 0, %s68
      %s71 = sphi 0, %s70
      %s85 = sphi 0, %s71
      %s89 = sphi 0, %s89
      %s91 = sphi 0, %s89
      %s92 = sphi 0, %s91
      %s106 = sphi 0, %s92
      %s110 = sphi 0, %s110
      %s112 = sphi 0, %s110
      %s113 = sphi 0, %s112
      %s127 = sphi 0, %s113
      %s135 = sphi 0, %s137
      %s138 = sphi 0, %s135
      %s139 = sphi 0, %s138
      %s155 = sphi 0, %s139
    $region4: #{conv2d_bn_relu.1} parent=1 // loop_header_branch
      %21 = sbr.rel (%p19) target = $region8
    $region5: #{conv2d_bn_relu.1} parent=1 // loop_body
      %s23 = ssub.s32 %s18, 1
      %s24 = ssub.s32 %s18, 2
      %s31 = sadd.s32 1, %s26
      %p32 = scmp.ge.s32.totalorder %s31, 1
      %s33 = scalar_select %p32, 0, %s31
      %s34 = sadd.s32 1, %s25
      %s35 = scalar_select %p32, %s34, %s25
      %p36 = scmp.ge.s32.totalorder %s35, 2
      %s37 = scalar_select %p36, 0, %s35
      %s38 = ssub.s32 1, %s25
      %s39 = smul.u32 %s38, %s26
      %s40 = ssub.s32 1, %s37
      %s41 = smul.u32 %s40, %s33
      %s42 = ssub.s32 %s39, %s41
      %p43 = scmp.eq.s32.totalorder %s42, 0
      %s45 = sadd.s32 %s44, 1
      %s46 = scalar_select %p43, %s44, %s45
      %p49 = pneg %p43
      %p50 = scmp.eq.s32.totalorder %s18, 1
      %p51 = por %p49, %p50
      %p52 = scmp.ne.s32.totalorder %s44, %s47
      %p53 = scmp.eq.s32.totalorder %s18, 0
      %p54 = por %p52, %p53
      %p55 = scmp.ne.s32.totalorder %s44, %s47
      %p56 = scmp.eq.s32.totalorder %s23, 1
      %p57 = por %p55, %p56
      %p58 = scmp.ne.s32.totalorder %s47, %s48
      %p59 = scmp.eq.s32.totalorder %s23, 0
      %p60 = por %p58, %p59
      %p61 = scmp.ne.s32.totalorder %s47, %s48
      %p62 = scmp.eq.s32.totalorder %s24, 1
      %p63 = por %p61, %p62
      %p65 = scmp.ne.s32.totalorder %s48, %s64
      %p66 = scmp.eq.s32.totalorder %s24, 0
      %p67 = por %p65, %p66
      %s69 = sadd.s32 %s68, 1
      %p72 = scmp.eq.s32.totalorder %s18, 1
      %p73 = scmp.ne.s32.totalorder %s68, %s70
      %p74 = scmp.eq.s32.totalorder %s18, 0
      %p75 = por %p73, %p74
      %p76 = scmp.ne.s32.totalorder %s68, %s70
      %p77 = scmp.eq.s32.totalorder %s23, 1
      %p78 = por %p76, %p77
      %p79 = scmp.ne.s32.totalorder %s70, %s71
      %p80 = scmp.eq.s32.totalorder %s23, 0
      %p81 = por %p79, %p80
      %p82 = scmp.ne.s32.totalorder %s70, %s71
      %p83 = scmp.eq.s32.totalorder %s24, 1
      %p84 = por %p82, %p83
      %p86 = scmp.ne.s32.totalorder %s71, %s85
      %p87 = scmp.eq.s32.totalorder %s24, 0
      %p88 = por %p86, %p87
      %s90 = sadd.s32 %s89, 1
      %p93 = scmp.eq.s32.totalorder %s18, 1
      %p94 = scmp.ne.s32.totalorder %s89, %s91
      %p95 = scmp.eq.s32.totalorder %s18, 0
      %p96 = por %p94, %p95
      %p97 = scmp.ne.s32.totalorder %s89, %s91
      %p98 = scmp.eq.s32.totalorder %s23, 1
      %p99 = por %p97, %p98
      %p100 = scmp.ne.s32.totalorder %s91, %s92
      %p101 = scmp.eq.s32.totalorder %s23, 0
      %p102 = por %p100, %p101
      %p103 = scmp.ne.s32.totalorder %s91, %s92
      %p104 = scmp.eq.s32.totalorder %s24, 1
      %p105 = por %p103, %p104
      %p107 = scmp.ne.s32.totalorder %s92, %s106
      %p108 = scmp.eq.s32.totalorder %s24, 0
      %p109 = por %p107, %p108
      %s111 = sadd.s32 %s110, 1
      %p114 = scmp.eq.s32.totalorder %s18, 1
      %p115 = scmp.ne.s32.totalorder %s110, %s112
      %p116 = scmp.eq.s32.totalorder %s18, 0
      %p117 = por %p115, %p116
      %p118 = scmp.ne.s32.totalorder %s110, %s112
      %p119 = scmp.eq.s32.totalorder %s23, 1
      %p120 = por %p118, %p119
      %p121 = scmp.ne.s32.totalorder %s112, %s113
      %p122 = scmp.eq.s32.totalorder %s23, 0
      %p123 = por %p121, %p122
      %p124 = scmp.ne.s32.totalorder %s112, %s113
      %p125 = scmp.eq.s32.totalorder %s24, 1
      %p126 = por %p124, %p125
      %p128 = scmp.ne.s32.totalorder %s113, %s127
      %p129 = scmp.eq.s32.totalorder %s24, 0
      %p130 = por %p128, %p129
      %s131 = smul.u32 %s25, %s26
      %s132 = smul.u32 %s37, %s33
      %s133 = ssub.s32 %s131, %s132
      %p134 = scmp.eq.s32.totalorder %s133, 0
      %s136 = sadd.s32 %s135, 1
      %s137 = scalar_select %p134, %s135, %s136
      %p140 = pneg %p134
      %p141 = scmp.eq.s32.totalorder %s18, 1
      %p142 = por %p140, %p141
      %p143 = scmp.ne.s32.totalorder %s135, %s138
      %p144 = scmp.eq.s32.totalorder %s18, 0
      %p145 = por %p143, %p144
      %p146 = scmp.ne.s32.totalorder %s135, %s138
      %p147 = scmp.eq.s32.totalorder %s23, 1
      %p148 = por %p146, %p147
      %p149 = scmp.ne.s32.totalorder %s138, %s139
      %p150 = scmp.eq.s32.totalorder %s23, 0
      %p151 = por %p149, %p150
      %p152 = scmp.ne.s32.totalorder %s138, %s139
      %p153 = scmp.eq.s32.totalorder %s24, 1
      %p154 = por %p152, %p153
      %p156 = scmp.ne.s32.totalorder %s139, %s155
      %p157 = scmp.eq.s32.totalorder %s24, 0
      %p158 = por %p156, %p157
      %p159 = scmp.le.s32.totalorder 1, %s18
      %p160 = scmp.lt.s32.totalorder %s18, 3
      %p161 = pnand %p159, %p160
      %p162 = pneg %p161
      // Predicated region
      $region9: #{conv2d_bn_relu.1} parent=5 // pred_check
        _
      $region10: #{conv2d_bn_relu.1} parent=5 // pred_check_branch
        %164 = sbr.rel (%p161) target = $region12
      $region11: #{conv2d_bn_relu.1} parent=5 // pred_region
        %s165 = ssub.s32 %s18, 1
        // Predicated region
        $region13: #{conv2d_bn_relu.1} parent=11 // pred_check
          %p166 = pneg %p81
        $region14: #{conv2d_bn_relu.1} parent=11 // pred_check_branch
          %168 = sbr.rel (%p166) target = $region16
        $region15: #{conv2d_bn_relu.1} parent=11 // pred_region
          %s170 = ssub.s32 2048, 2048
          %171 = vsyncadd [#allocation11], %s170
          %s172 = sshll.u32 [#allocation10], 4
          %s173 = int_to_ptr.vmem [resolvable:$true] %s172
          %178 = dma.hbm_to_vmem [thread:$0]  %s1, 2048, %s173, [#allocation11], 128, 128, 8
        $region16: #{conv2d_bn_relu.1} parent=11 // pred_fallthru
          _
        // Predicated region
        $region17: #{conv2d_bn_relu.1} parent=11 // pred_check
          %p179 = pneg %p102
        $region18: #{conv2d_bn_relu.1} parent=11 // pred_check_branch
          %181 = sbr.rel (%p179) target = $region20
        $region19: #{conv2d_bn_relu.1} parent=11 // pred_region
          %s183 = ssub.s32 128, 128
          %184 = vsyncadd [#allocation11], %s183
          %s186 = sshll.u32 [#allocation12], 4
          %s187 = int_to_ptr.vmem [resolvable:$true] %s186
          %189 = dma.hbm_to_vmem [thread:$0]  %s2, 128, %s187, [#allocation11]
        $region20: #{conv2d_bn_relu.1} parent=11 // pred_fallthru
          _
        // Predicated region
        $region21: #{conv2d_bn_relu.1} parent=11 // pred_check
          %p190 = pneg %p123
        $region22: #{conv2d_bn_relu.1} parent=11 // pred_check_branch
          %192 = sbr.rel (%p190) target = $region24
        $region23: #{conv2d_bn_relu.1} parent=11 // pred_region
          %s194 = ssub.s32 8192, 8192
          %195 = vsyncadd [#allocation14], %s194
          %s196 = sshll.u32 [#allocation13], 4
          %s197 = int_to_ptr.vmem [resolvable:$true] %s196
          %202 = dma.hbm_to_vmem [thread:$0]  %s3, 8192, %s197, [#allocation14], 256, 256, 16
        $region24: #{conv2d_bn_relu.1} parent=11 // pred_fallthru
          _
      $region12: #{conv2d_bn_relu.1} parent=5 // pred_fallthru
        _
      %p203 = scmp.lt.s32.totalorder %s18, 2
      // Predicated region
      $region25: #{conv2d_bn_relu.1} parent=5 // pred_check
        %p204 = pneg %p203
      $region26: #{conv2d_bn_relu.1} parent=5 // pred_check_branch
        %206 = sbr.rel (%p204) target = $region28
      $region27: #{conv2d_bn_relu.1} parent=5 // pred_region
        // Predicated region
        $region29: #{conv2d_bn_relu.1} parent=27 // pred_check
          %p207 = pneg %p54
        $region30: #{conv2d_bn_relu.1} parent=27 // pred_check_branch
          %209 = sbr.rel (%p207) target = $region32
        $region31: #{conv2d_bn_relu.1} parent=27 // pred_region
          %s210 = sand.u32 %s44, 1
          %s211 = scalar_lea.sflag [#allocation8], %s210
          %s212 = sand.u32 %s44, 1
          %s213 = smul.addr %s212, 16
          %s214 = scalar_lea.vmem [#allocation7], %s213
          %s215 = ssub.s32 1, %s25
          %s216 = smul.u32 %s215, %s26
          %s217 = smul.u32 2, %s216
          %s219 = ssub.s32 256, 256
          %220 = vsyncadd %s211, %s219
          %s221 = smul.addr %s217, 128
          %s222 = scalar_lea.hbm %s0, %s221
          %s223 = sshll.u32 %s214, 4
          %s224 = int_to_ptr.vmem [resolvable:$true] %s223
          %229 = dma.hbm_to_vmem [thread:$0]  %s222, 256, %s224, %s211, 128, 128, 8
        $region32: #{conv2d_bn_relu.1} parent=27 // pred_fallthru
          _
      $region28: #{conv2d_bn_relu.1} parent=5 // pred_fallthru
        _
      %p230 = scmp.le.s32.totalorder 1, %s18
      %p231 = scmp.lt.s32.totalorder %s18, 3
      %p232 = pnand %p230, %p231
      %p233 = pneg %p232
      // Predicated region
      $region33: #{conv2d_bn_relu.1} parent=5 // pred_check
        _
      $region34: #{conv2d_bn_relu.1} parent=5 // pred_check_branch
        %235 = sbr.rel (%p232) target = $region36
      $region35: #{conv2d_bn_relu.1} parent=5 // pred_region
        %s236 = ssub.s32 %s18, 1
        %s237 = sand.u32 %s47, 1
        %s238 = scalar_lea.sflag [#allocation8], %s237
        %s239 = sand.u32 %s47, 1
        %s240 = smul.addr %s239, 16
        %s241 = scalar_lea.vmem [#allocation7], %s240
        // Predicated region
        $region37: #{conv2d_bn_relu.1} parent=35 // pred_check
          %p242 = pneg %p60
        $region38: #{conv2d_bn_relu.1} parent=35 // pred_check_branch
          %244 = sbr.rel (%p242) target = $region40
        $region39: #{conv2d_bn_relu.1} parent=35 // pred_region
          %245 = dma.done %s238, 256
        $region40: #{conv2d_bn_relu.1} parent=35 // pred_fallthru
          _
        // Predicated region
        $region41: #{conv2d_bn_relu.1} parent=35 // pred_check
          %p246 = pneg %p81
        $region42: #{conv2d_bn_relu.1} parent=35 // pred_check_branch
          %248 = sbr.rel (%p246) target = $region44
        $region43: #{conv2d_bn_relu.1} parent=35 // pred_region
          %249 = dma.done [#allocation11], 2048
        $region44: #{conv2d_bn_relu.1} parent=35 // pred_fallthru
          _
        // Predicated region
        $region45: #{conv2d_bn_relu.1} parent=35 // pred_check
          %p250 = pneg %p102
        $region46: #{conv2d_bn_relu.1} parent=35 // pred_check_branch
          %252 = sbr.rel (%p250) target = $region48
        $region47: #{conv2d_bn_relu.1} parent=35 // pred_region
          %253 = dma.done [#allocation11], 128
        $region48: #{conv2d_bn_relu.1} parent=35 // pred_fallthru
          _
        // Predicated region
        $region49: #{conv2d_bn_relu.1} parent=35 // pred_check
          %p254 = pneg %p123
        $region50: #{conv2d_bn_relu.1} parent=35 // pred_check_branch
          %256 = sbr.rel (%p254) target = $region52
        $region51: #{conv2d_bn_relu.1} parent=35 // pred_region
          %257 = dma.done [#allocation14], 8192
        $region52: #{conv2d_bn_relu.1} parent=35 // pred_fallthru
          _
        %s258 = sand.u32 %s47, 1
        %s259 = scalar_lea.sflag [#allocation8], %s258
        %s260 = sand.u32 %s47, 1
        %s261 = smul.addr %s260, 16
        %s262 = scalar_lea.vmem [#allocation7], %s261
        %p263 = pneg %p60
        %p264 = pneg %p57
        %p265 = pneg %p81
        %p266 = pneg %p78
        %p267 = pneg %p102
        %p268 = pneg %p99
        %p269 = pneg %p123
        %p270 = pneg %p120
        %p271 = pneg %p151
        %p272 = pneg %p148
        %s273 = sand.u32 %s138, 1
        %s274 = scalar_lea.sflag [#allocation9], %s273
        %s275 = sand.u32 %s138, 1
        %s276 = smul.addr %s275, 32
        %s277 = scalar_lea.vmem [#allocation15], %s276
        %s278 = ssub.s32 1, %s27
        %s279 = smul.u32 %s278, %s28
        %s280 = smul.u32 2, %s279
        %s281 = smul.u32 %s27, %s28
        %s282 = smul.u32 2, %s281
        %p284 = scmp.eq.s32.totalorder %s27, 0
        // Predicated region
        $region53: #{conv2d_bn_relu.1} parent=35 // pred_check
          %p285 = pneg %p284
        $region54: #{conv2d_bn_relu.1} parent=35 // pred_check_branch
          %287 = sbr.rel (%p285) target = $region56
        $region55: #{conv2d_bn_relu.1} parent=35 // pred_region
          %p288 = scmp.eq.s32.totalorder %s28, 0
          // Predicated region
          $region57: #{conv2d_bn_relu.1} parent=55 // pred_check
            %p289 = pneg %p288
          $region58: #{conv2d_bn_relu.1} parent=55 // pred_check_branch
            %291 = sbr.rel (%p289) target = $region60
          $region59: #{conv2d_bn_relu.1} parent=55 // pred_region
            %v292 = vlaneseq
            %vm293 = vcmp.ge.s32.totalorder %v292, 0
            %vm294 = vcmp.lt.s32.totalorder %v292, 256
            %vm295 = vmand %vm293, %vm294
            %296 = vst.msk [vmem:[#allocation3] sm:$0x3] %vm295, 0.0
            %297 = vst.msk [vmem:[#allocation4] sm:$0x3] %vm295, 0.0
            %298 = vst [vmem:[%s277] sm:$0xff] 0.0
            %299 = vst [vmem:[%s277 + $0x8] sm:$0xff] 0.0
            %300 = vst [vmem:[%s277 + $0x10] sm:$0xff] 0.0
            %301 = vst [vmem:[%s277 + $0x18] sm:$0xff] 0.0
          $region60: #{conv2d_bn_relu.1} parent=55 // pred_fallthru
            _
          %v302 = vld [vmem:[%s241] sm:$0xff]
          %v303 = vld [vmem:[%s241 + $0x8] sm:$0xff]
          %v304 = vpack.c.bf16 %v303, %v302
          %v305 = vld [vmem:[#allocation10] sm:$0xff]
          %v306 = vld [vmem:[#allocation10 + $0x8] sm:$0xff]
          %v307 = vld [vmem:[#allocation10 + $0x10] sm:$0xff]
          %v308 = vld [vmem:[#allocation10 + $0x18] sm:$0xff]
          %v309 = vld [vmem:[#allocation10 + $0x20] sm:$0xff]
          %v310 = vld [vmem:[#allocation10 + $0x28] sm:$0xff]
          %v311 = vld [vmem:[#allocation10 + $0x30] sm:$0xff]
          %v312 = vld [vmem:[#allocation10 + $0x38] sm:$0xff]
          %v313 = vld [vmem:[#allocation10 + $0x40] sm:$0xff]
          %v314 = vld [vmem:[#allocation10 + $0x48] sm:$0xff]
          %v315 = vld [vmem:[#allocation10 + $0x50] sm:$0xff]
          %v316 = vld [vmem:[#allocation10 + $0x58] sm:$0xff]
          %v317 = vld [vmem:[#allocation10 + $0x60] sm:$0xff]
          %v318 = vld [vmem:[#allocation10 + $0x68] sm:$0xff]
          %v319 = vld [vmem:[#allocation10 + $0x70] sm:$0xff]
          %v320 = vld [vmem:[#allocation10 + $0x78] sm:$0xff]
          %v321 = vld [vmem:[#allocation12] ss:$4 sm:$0x3]
          %v323 = vlaneseq
          %v324 = vshrl.u32 %v323, 7
          %v325 = vsub.s32 0, %v324
          %v326 = vrot.slane %v321, %v325
          %v327 = vlaneseq
          %v328 = vshrl.u32 %v327, 7
          %v329 = vsub.s32 1, %v328
          %v330 = vrot.slane %v321, %v329
          %v349 = vunpack.c.l.b16 %v305
          %v350 = vunpack.c.h.b16 %v305
          %v351 = vunpack.c.l.b16 %v306
          %v352 = vunpack.c.h.b16 %v306
          %v353 = vunpack.c.l.b16 %v307
          %v354 = vunpack.c.h.b16 %v307
          %v355 = vunpack.c.l.b16 %v308
          %v356 = vunpack.c.h.b16 %v308
          %v357 = vunpack.c.l.b16 %v309
          %v358 = vunpack.c.h.b16 %v309
          %v359 = vunpack.c.l.b16 %v310
          %v360 = vunpack.c.h.b16 %v310
          %v361 = vunpack.c.l.b16 %v311
          %v362 = vunpack.c.h.b16 %v311
          %v363 = vunpack.c.l.b16 %v312
          %v364 = vunpack.c.h.b16 %v312
          %v365 = vunpack.c.l.b16 %v313
          %v366 = vunpack.c.h.b16 %v313
          %v367 = vunpack.c.l.b16 %v314
          %v368 = vunpack.c.h.b16 %v314
          %v369 = vunpack.c.l.b16 %v315
          %v370 = vunpack.c.h.b16 %v315
          %v371 = vunpack.c.l.b16 %v316
          %v372 = vunpack.c.h.b16 %v316
          %v373 = vunpack.c.l.b16 %v317
          %v374 = vunpack.c.h.b16 %v317
          %v375 = vunpack.c.l.b16 %v318
          %v376 = vunpack.c.h.b16 %v318
          %v377 = vunpack.c.l.b16 %v319
          %v378 = vunpack.c.h.b16 %v319
          %v379 = vunpack.c.l.b16 %v320
          %v380 = vunpack.c.h.b16 %v320
          %v381 = vpack.c.b16 %v351, %v349
          %v382 = vpack.c.b16 %v352, %v350
          %v383 = vpack.c.b16 %v355, %v353
          %v384 = vpack.c.b16 %v356, %v354
          %v385 = vpack.c.b16 %v359, %v357
          %v386 = vpack.c.b16 %v360, %v358
          %v387 = vpack.c.b16 %v363, %v361
          %v388 = vpack.c.b16 %v364, %v362
          %v389 = vpack.c.b16 %v367, %v365
          %v390 = vpack.c.b16 %v368, %v366
          %v391 = vpack.c.b16 %v371, %v369
          %v392 = vpack.c.b16 %v372, %v370
          %v393 = vpack.c.b16 %v375, %v373
          %v394 = vpack.c.b16 %v376, %v374
          %v395 = vpack.c.b16 %v379, %v377
          %v396 = vpack.c.b16 %v380, %v378
          %413 = vmatprep.subr.bf16.mxu0 %v382
          %414 = vmatpush1.bf16.msra.mxu0 %v381
          %415 = vmatprep.subr.bf16.mxu0 %v384
          %416 = vmatpush1.bf16.msra.mxu0 %v383
          %417 = vmatprep.subr.bf16.mxu0 %v386
          %418 = vmatpush1.bf16.msra.mxu0 %v385
          %419 = vmatprep.subr.bf16.mxu0 %v388
          %420 = vmatpush1.bf16.msra.mxu0 %v387
          %421 = vmatprep.subr.bf16.mxu0 %v390
          %422 = vmatpush1.bf16.msra.mxu0 %v389
          %423 = vmatprep.subr.bf16.mxu0 %v392
          %424 = vmatpush1.bf16.msra.mxu0 %v391
          %425 = vmatprep.subr.bf16.mxu0 %v394
          %426 = vmatpush1.bf16.msra.mxu0 %v393
          %427 = vmatprep.subr.bf16.mxu0 %v396
          %428 = vmatpush1.bf16.msra.mxu0 %v395
          %429 = vmatprep.subr.bf16.mxu0 0
          %430 = vmatpush1.bf16.msra.mxu0 0
          %431 = vmatprep.subr.bf16.mxu0 0
          %432 = vmatpush1.bf16.msra.mxu0 0
          %433 = vmatprep.subr.bf16.mxu0 0
          %434 = vmatpush1.bf16.msra.mxu0 0
          %435 = vmatprep.subr.bf16.mxu0 0
          %436 = vmatpush1.bf16.msra.mxu0 0
          %437 = vmatprep.subr.bf16.mxu0 0
          %438 = vmatpush1.bf16.msra.mxu0 0
          %439 = vmatprep.subr.bf16.mxu0 0
          %440 = vmatpush1.bf16.msra.mxu0 0
          %441 = vmatprep.subr.bf16.mxu0 0
          %442 = vmatpush1.bf16.msra.mxu0 0
          %443 = vmatprep.subr.bf16.mxu0 0
          %444 = vmatpush1.bf16.msra.mxu0 0
          %445 = vmatprep.mubr.bf16.mxu0 0
          %446 = vmatmul.mubr.bf16.gmra.mrb[0].mxu0 %v304
          %v447 = vpop.f32.mrb[0].mxu0
          %v448 = vadd.f32 %v326, %v447
          %v449 = vpop.f32.mrb[0].mxu0
          %v450 = vadd.f32 %v330, %v449
          %v451 = vpop.f32.mrb[0].mxu0
          %v452 = vadd.f32 %v326, %v451
          %v453 = vpop.f32.mrb[0].mxu0
          %v454 = vadd.f32 %v330, %v453
          %455 = vdwg.mxu0
          %v456 = vpack.c.bf16 %v452, %v448
          %v457 = vpack.c.bf16 %v454, %v450
          %s458 = smul.u32 %s28, 2
          %s459 = smul.addr %s458, 8
          %s460 = scalar_lea.vmem [#allocation2], %s459
          %461 = vst [vmem:[%s460] sm:$0xff] %v456
          %462 = vst [vmem:[%s460 + $0x8] sm:$0xff] %v457
          %v463 = vld [vmem:[#allocation3] sm:$0x3]
          %v464 = vadd.f32 %v448, %v452
          %v465 = vrot.slane %v464, 4
          %v466 = vadd.f32 %v464, %v465
          %v467 = vrot.slane %v466, 2
          %v468 = vadd.f32 %v466, %v467
          %v469 = vrot.slane %v468, 1
          %v470 = vadd.f32 %v468, %v469
          %v471 = vadd.f32 %v450, %v454
          %v472 = vrot.slane %v471, 4
          %v473 = vadd.f32 %v471, %v472
          %v474 = vrot.slane %v473, 2
          %v475 = vadd.f32 %v473, %v474
          %v476 = vrot.slane %v475, 1
          %v477 = vadd.f32 %v475, %v476
          %v480 = vcombine.low %v470, %v477
          %v482 = vunpack.c.l.s4 1966171168
          %v483 = vunpack.c.0.s8 %v482
          %v484 = vlaneseq
          %v485 = vshrl.u32 %v484, 7
          %v486 = vsub.s32 %v483, %v485
          %v487 = vrot.slane %v480, %v486
          %v489 = vunpack.c.l.s4 1966171168
          %v490 = vunpack.c.0.s8 %v489
          %v491 = vlaneseq
          %v492 = vshrl.u32 %v491, 7
          %v493 = vsub.s32 %v490, %v492
          %v494 = vrot.slane %v487, %v493
          %v496 = vadd.f32 %v463, %v494
          %v497 = vlaneseq
          %vm498 = vcmp.ge.s32.totalorder %v497, 0
          %vm499 = vcmp.lt.s32.totalorder %v497, 256
          %vm500 = vmand %vm498, %vm499
          %501 = vst.msk [vmem:[#allocation3] sm:$0x3] %vm500, %v496
          %v502 = vld [vmem:[#allocation4] sm:$0x3]
          %v503 = vmul.f32 %v448, %v448
          %v504 = vmul.f32 %v450, %v450
          %v505 = vmul.f32 %v452, %v452
          %v506 = vmul.f32 %v454, %v454
          %v507 = vadd.f32 %v503, %v505
          %v508 = vrot.slane %v507, 4
          %v509 = vadd.f32 %v507, %v508
          %v510 = vrot.slane %v509, 2
          %v511 = vadd.f32 %v509, %v510
          %v512 = vrot.slane %v511, 1
          %v513 = vadd.f32 %v511, %v512
          %v514 = vadd.f32 %v504, %v506
          %v515 = vrot.slane %v514, 4
          %v516 = vadd.f32 %v514, %v515
          %v517 = vrot.slane %v516, 2
          %v518 = vadd.f32 %v516, %v517
          %v519 = vrot.slane %v518, 1
          %v520 = vadd.f32 %v518, %v519
          %v523 = vcombine.low %v513, %v520
          %v525 = vunpack.c.l.s4 1966171168
          %v526 = vunpack.c.0.s8 %v525
          %v527 = vlaneseq
          %v528 = vshrl.u32 %v527, 7
          %v529 = vsub.s32 %v526, %v528
          %v530 = vrot.slane %v523, %v529
          %v532 = vunpack.c.l.s4 1966171168
          %v533 = vunpack.c.0.s8 %v532
          %v534 = vlaneseq
          %v535 = vshrl.u32 %v534, 7
          %v536 = vsub.s32 %v533, %v535
          %v537 = vrot.slane %v530, %v536
          %v539 = vadd.f32 %v502, %v537
          %540 = vst.msk [vmem:[#allocation4] sm:$0x3] %vm500, %v539
          // Predicated region
          $region61: #{conv2d_bn_relu.1} parent=55 // pred_check
            %p541 = pneg %p288
          $region62: #{conv2d_bn_relu.1} parent=55 // pred_check_branch
            %543 = sbr.rel (%p541) target = $region64
          $region63: #{conv2d_bn_relu.1} parent=55 // pred_region
            %v544 = vld [vmem:[#allocation3] sm:$0x3]
            %v545 = vld [vmem:[#allocation4] sm:$0x3]
            %v547 = vlaneseq
            %v548 = vshrl.u32 %v547, 7
            %v549 = vsub.s32 0, %v548
            %v550 = vrot.slane %v544, %v549
            %v551 = vlaneseq
            %v552 = vshrl.u32 %v551, 7
            %v553 = vsub.s32 1, %v552
            %v554 = vrot.slane %v544, %v553
            %v558 = vlaneseq
            %v559 = vshrl.u32 %v558, 7
            %v560 = vsub.s32 0, %v559
            %v561 = vrot.slane %v545, %v560
            %v562 = vlaneseq
            %v563 = vshrl.u32 %v562, 7
            %v564 = vsub.s32 1, %v563
            %v565 = vrot.slane %v545, %v564
            %vm568 = vcmask 1040384
            %v569 = vsel %vm568, %v550, %v561
            %v570 = vsel %vm568, %v554, %v565
            %v571 = vld [vmem:[#allocation13] sm:$0xff]
            %v572 = vld [vmem:[#allocation13 + $0x8] sm:$0xff]
            %v573 = vld [vmem:[#allocation13 + $0x10] sm:$0xff]
            %v574 = vld [vmem:[#allocation13 + $0x18] sm:$0xff]
            %v575 = vld [vmem:[#allocation13 + $0x20] sm:$0xff]
            %v576 = vld [vmem:[#allocation13 + $0x28] sm:$0xff]
            %v577 = vld [vmem:[#allocation13 + $0x30] sm:$0xff]
            %v578 = vld [vmem:[#allocation13 + $0x38] sm:$0xff]
            %v579 = vld [vmem:[#allocation13 + $0x40] sm:$0xff]
            %v580 = vld [vmem:[#allocation13 + $0x48] sm:$0xff]
            %v581 = vld [vmem:[#allocation13 + $0x50] sm:$0xff]
            %v582 = vld [vmem:[#allocation13 + $0x58] sm:$0xff]
            %v583 = vld [vmem:[#allocation13 + $0x60] sm:$0xff]
            %v584 = vld [vmem:[#allocation13 + $0x68] sm:$0xff]
            %v585 = vld [vmem:[#allocation13 + $0x70] sm:$0xff]
            %v586 = vld [vmem:[#allocation13 + $0x78] sm:$0xff]
            %v587 = vld [vmem:[#allocation13 + $0x80] sm:$0xff]
            %v588 = vld [vmem:[#allocation13 + $0x88] sm:$0xff]
            %v589 = vld [vmem:[#allocation13 + $0x90] sm:$0xff]
            %v590 = vld [vmem:[#allocation13 + $0x98] sm:$0xff]
            %v591 = vld [vmem:[#allocation13 + $0xa0] sm:$0xff]
            %v592 = vld [vmem:[#allocation13 + $0xa8] sm:$0xff]
            %v593 = vld [vmem:[#allocation13 + $0xb0] sm:$0xff]
            %v594 = vld [vmem:[#allocation13 + $0xb8] sm:$0xff]
            %v595 = vld [vmem:[#allocation13 + $0xc0] sm:$0xff]
            %v596 = vld [vmem:[#allocation13 + $0xc8] sm:$0xff]
            %v597 = vld [vmem:[#allocation13 + $0xd0] sm:$0xff]
            %v598 = vld [vmem:[#allocation13 + $0xd8] sm:$0xff]
            %v599 = vld [vmem:[#allocation13 + $0xe0] sm:$0xff]
            %v600 = vld [vmem:[#allocation13 + $0xe8] sm:$0xff]
            %v601 = vld [vmem:[#allocation13 + $0xf0] sm:$0xff]
            %v602 = vld [vmem:[#allocation13 + $0xf8] sm:$0xff]
            %v603 = vld [vmem:[#allocation13 + $0x100] sm:$0xff]
            %v604 = vld [vmem:[#allocation13 + $0x108] sm:$0xff]
            %v605 = vld [vmem:[#allocation13 + $0x110] sm:$0xff]
            %v606 = vld [vmem:[#allocation13 + $0x118] sm:$0xff]
            %v607 = vld [vmem:[#allocation13 + $0x120] sm:$0xff]
            %v608 = vld [vmem:[#allocation13 + $0x128] sm:$0xff]
            %v609 = vld [vmem:[#allocation13 + $0x130] sm:$0xff]
            %v610 = vld [vmem:[#allocation13 + $0x138] sm:$0xff]
            %v611 = vld [vmem:[#allocation13 + $0x140] sm:$0xff]
            %v612 = vld [vmem:[#allocation13 + $0x148] sm:$0xff]
            %v613 = vld [vmem:[#allocation13 + $0x150] sm:$0xff]
            %v614 = vld [vmem:[#allocation13 + $0x158] sm:$0xff]
            %v615 = vld [vmem:[#allocation13 + $0x160] sm:$0xff]
            %v616 = vld [vmem:[#allocation13 + $0x168] sm:$0xff]
            %v617 = vld [vmem:[#allocation13 + $0x170] sm:$0xff]
            %v618 = vld [vmem:[#allocation13 + $0x178] sm:$0xff]
            %v619 = vld [vmem:[#allocation13 + $0x180] sm:$0xff]
            %v620 = vld [vmem:[#allocation13 + $0x188] sm:$0xff]
            %v621 = vld [vmem:[#allocation13 + $0x190] sm:$0xff]
            %v622 = vld [vmem:[#allocation13 + $0x198] sm:$0xff]
            %v623 = vld [vmem:[#allocation13 + $0x1a0] sm:$0xff]
            %v624 = vld [vmem:[#allocation13 + $0x1a8] sm:$0xff]
            %v625 = vld [vmem:[#allocation13 + $0x1b0] sm:$0xff]
            %v626 = vld [vmem:[#allocation13 + $0x1b8] sm:$0xff]
            %v627 = vld [vmem:[#allocation13 + $0x1c0] sm:$0xff]
            %v628 = vld [vmem:[#allocation13 + $0x1c8] sm:$0xff]
            %v629 = vld [vmem:[#allocation13 + $0x1d0] sm:$0xff]
            %v630 = vld [vmem:[#allocation13 + $0x1d8] sm:$0xff]
            %v631 = vld [vmem:[#allocation13 + $0x1e0] sm:$0xff]
            %v632 = vld [vmem:[#allocation13 + $0x1e8] sm:$0xff]
            %v633 = vld [vmem:[#allocation13 + $0x1f0] sm:$0xff]
            %v634 = vld [vmem:[#allocation13 + $0x1f8] sm:$0xff]
            %635 = vmatprep.subr.mxu0 %v572
            %636 = vmatpush1.msra.mxu0 %v571
            %637 = vmatprep.subr.mxu0 %v574
            %638 = vmatpush1.msra.mxu0 %v573
            %639 = vmatprep.subr.mxu0 %v576
            %640 = vmatpush1.msra.mxu0 %v575
            %641 = vmatprep.subr.mxu0 %v578
            %642 = vmatpush1.msra.mxu0 %v577
            %643 = vmatprep.subr.mxu0 %v580
            %644 = vmatpush1.msra.mxu0 %v579
            %645 = vmatprep.subr.mxu0 %v582
            %646 = vmatpush1.msra.mxu0 %v581
            %647 = vmatprep.subr.mxu0 %v584
            %648 = vmatpush1.msra.mxu0 %v583
            %649 = vmatprep.subr.mxu0 %v586
            %650 = vmatpush1.msra.mxu0 %v585
            %651 = vmatprep.subr.mxu0 %v588
            %652 = vmatpush1.msra.mxu0 %v587
            %653 = vmatprep.subr.mxu0 %v590
            %654 = vmatpush1.msra.mxu0 %v589
            %655 = vmatprep.subr.mxu0 %v592
            %656 = vmatpush1.msra.mxu0 %v591
            %657 = vmatprep.subr.mxu0 %v594
            %658 = vmatpush1.msra.mxu0 %v593
            %659 = vmatprep.subr.mxu0 %v596
            %660 = vmatpush1.msra.mxu0 %v595
            %661 = vmatprep.subr.mxu0 %v598
            %662 = vmatpush1.msra.mxu0 %v597
            %663 = vmatprep.subr.mxu0 %v600
            %664 = vmatpush1.msra.mxu0 %v599
            %665 = vmatprep.subr.mxu0 %v602
            %666 = vmatpush1.msra.mxu0 %v601
            %667 = vmatprep.subr.mxu0 %v604
            %668 = vmatpush1.msra.mxu0 %v603
            %669 = vmatprep.subr.mxu0 %v606
            %670 = vmatpush1.msra.mxu0 %v605
            %671 = vmatprep.subr.mxu0 %v608
            %672 = vmatpush1.msra.mxu0 %v607
            %673 = vmatprep.subr.mxu0 %v610
            %674 = vmatpush1.msra.mxu0 %v609
            %675 = vmatprep.subr.mxu0 %v612
            %676 = vmatpush1.msra.mxu0 %v611
            %677 = vmatprep.subr.mxu0 %v614
            %678 = vmatpush1.msra.mxu0 %v613
            %679 = vmatprep.subr.mxu0 %v616
            %680 = vmatpush1.msra.mxu0 %v615
            %681 = vmatprep.subr.mxu0 %v618
            %682 = vmatpush1.msra.mxu0 %v617
            %683 = vmatprep.subr.mxu0 %v620
            %684 = vmatpush1.msra.mxu0 %v619
            %685 = vmatprep.subr.mxu0 %v622
            %686 = vmatpush1.msra.mxu0 %v621
            %687 = vmatprep.subr.mxu0 %v624
            %688 = vmatpush1.msra.mxu0 %v623
            %689 = vmatprep.subr.mxu0 %v626
            %690 = vmatpush1.msra.mxu0 %v625
            %691 = vmatprep.subr.mxu0 %v628
            %692 = vmatpush1.msra.mxu0 %v627
            %693 = vmatprep.subr.mxu0 %v630
            %694 = vmatpush1.msra.mxu0 %v629
            %695 = vmatprep.subr.mxu0 %v632
            %696 = vmatpush1.msra.mxu0 %v631
            %697 = vmatprep.subr.mxu0 %v634
            %698 = vmatpush1.msra.mxu0 %v633
            %699 = vmatprep.mubr.f32.mxu0 %v570
            %700 = vmatmul.mubr.f32.gmra.mrb[0].mxu0 %v569
            %v701 = vpop.f32.mrb[0].mxu0
            %v702 = vadd.f32 0.0, %v701
            %v703 = vpop.f32.mrb[0].mxu0
            %v704 = vadd.f32 0.0, %v703
            %705 = vdwg.mxu0
            %v706 = vmul.f32 %v702, 0.001953125
            %v707 = vmul.f32 %v704, 0.001953125
            %v708 = vmul.f32 %v706, %v706
            %v709 = vmul.f32 %v707, %v707
            %v712 = vrot.slane %v708, 7
            %v713 = vrot.slane %v709, 7
            %v716 = vsub.f32 %v706, %v712
            %v717 = vsub.f32 %v707, %v713
            %v718 = vmax.f32 %v716, 0.0
            %v719 = vmax.f32 %v717, 0.0
            %s720 = scalar_lea.vmem [#allocation12], 1
            %v721 = vld [vmem:[%s720] ss:$4 sm:$0x3]
            %v722 = vadd.f32 %v718, 1e-05
            %v723 = vadd.f32 %v719, 1e-05
            %v724 = vrsqrt.pop %v722
            %v725 = vrsqrt.pop %v723
            %v728 = vcombine.low %v724, %v725
            %v730 = vunpack.c.l.s4 1966171168
            %v731 = vunpack.c.0.s8 %v730
            %v732 = vlaneseq
            %v733 = vshrl.u32 %v732, 7
            %v734 = vsub.s32 %v731, %v733
            %v735 = vrot.slane %v728, %v734
            %v736 = vcombine.high %v735, %v735
            %v738 = vunpack.c.l.s4 1966171168
            %v739 = vunpack.c.0.s8 %v738
            %v740 = vlaneseq
            %v741 = vshrl.u32 %v740, 7
            %v742 = vsub.s32 %v739, %v741
            %v743 = vrot.slane %v736, %v742
            %v745 = vmul.f32 %v721, %v743
            %746 = vst.msk [vmem:[#allocation5] sm:$0x3] %vm500, %v745
            %s747 = scalar_lea.vmem [#allocation12], 2
            %v748 = vld [vmem:[%s747] ss:$4 sm:$0x3]
            %v750 = vlaneseq
            %v751 = vshrl.u32 %v750, 7
            %v752 = vsub.s32 0, %v751
            %v753 = vrot.slane %v745, %v752
            %v754 = vlaneseq
            %v755 = vshrl.u32 %v754, 7
            %v756 = vsub.s32 1, %v755
            %v757 = vrot.slane %v745, %v756
            %v760 = vmul.f32 %v706, %v753
            %v761 = vmul.f32 %v707, %v757
            %v764 = vcombine.low %v760, %v761
            %v766 = vunpack.c.l.s4 1966171168
            %v767 = vunpack.c.0.s8 %v766
            %v768 = vlaneseq
            %v769 = vshrl.u32 %v768, 7
            %v770 = vsub.s32 %v767, %v769
            %v771 = vrot.slane %v764, %v770
            %v773 = vunpack.c.l.s4 1966171168
            %v774 = vunpack.c.0.s8 %v773
            %v775 = vlaneseq
            %v776 = vshrl.u32 %v775, 7
            %v777 = vsub.s32 %v774, %v776
            %v778 = vrot.slane %v771, %v777
            %v780 = vsub.f32 %v748, %v778
            %781 = vst.msk [vmem:[#allocation6] sm:$0x3] %vm500, %v780
          $region64: #{conv2d_bn_relu.1} parent=55 // pred_fallthru
            _
        $region56: #{conv2d_bn_relu.1} parent=35 // pred_fallthru
          _
        %p782 = scmp.eq.s32.totalorder %s27, 1
        // Predicated region
        $region65: #{conv2d_bn_relu.1} parent=35 // pred_check
          %p783 = pneg %p782
        $region66: #{conv2d_bn_relu.1} parent=35 // pred_check_branch
          %785 = sbr.rel (%p783) target = $region68
        $region67: #{conv2d_bn_relu.1} parent=35 // pred_region
          %s786 = smul.u32 %s28, 2
          %s787 = smul.addr %s786, 8
          %s788 = scalar_lea.vmem [#allocation2], %s787
          %v789 = vld [vmem:[%s788] sm:$0xff]
          %v790 = vld [vmem:[%s788 + $0x8] sm:$0xff]
          %v791 = vunpack.c.l.bf16 %v789
          %v792 = vunpack.c.l.bf16 %v790
          %v793 = vunpack.c.h.bf16 %v789
          %v794 = vunpack.c.h.bf16 %v790
          %v795 = vld [vmem:[#allocation5] sm:$0x3]
          %v797 = vlaneseq
          %v798 = vshrl.u32 %v797, 7
          %v799 = vsub.s32 0, %v798
          %v800 = vrot.slane %v795, %v799
          %v801 = vlaneseq
          %v802 = vshrl.u32 %v801, 7
          %v803 = vsub.s32 1, %v802
          %v804 = vrot.slane %v795, %v803
          %v807 = vmul.f32 %v791, %v800
          %v808 = vmul.f32 %v792, %v804
          %v809 = vmul.f32 %v793, %v800
          %v810 = vmul.f32 %v794, %v804
          %v811 = vld [vmem:[#allocation6] sm:$0x3]
          %v813 = vlaneseq
          %v814 = vshrl.u32 %v813, 7
          %v815 = vsub.s32 0, %v814
          %v816 = vrot.slane %v811, %v815
          %v817 = vlaneseq
          %v818 = vshrl.u32 %v817, 7
          %v819 = vsub.s32 1, %v818
          %v820 = vrot.slane %v811, %v819
          %v823 = vadd.f32 %v807, %v816
          %v824 = vadd.f32 %v808, %v820
          %v825 = vadd.f32 %v809, %v816
          %v826 = vadd.f32 %v810, %v820
          %v827 = vmax.f32 %v823, 0.0
          %v828 = vmax.f32 %v824, 0.0
          %v829 = vmax.f32 %v825, 0.0
          %v830 = vmax.f32 %v826, 0.0
          %831 = vst [vmem:[%s277] sm:$0xff] %v827
          %832 = vst [vmem:[%s277 + $0x8] sm:$0xff] %v828
          %833 = vst [vmem:[%s277 + $0x10] sm:$0xff] %v829
          %834 = vst [vmem:[%s277 + $0x18] sm:$0xff] %v830
        $region68: #{conv2d_bn_relu.1} parent=35 // pred_fallthru
          _
        %s835 = sand.u32 %s138, 1
        %s836 = scalar_lea.sflag [#allocation9], %s835
        %s837 = sand.u32 %s138, 1
        %s838 = smul.addr %s837, 32
        %s839 = scalar_lea.vmem [#allocation15], %s838
        // Predicated region
        $region69: #{conv2d_bn_relu.1} parent=35 // pred_check
          %p840 = pneg %p148
        $region70: #{conv2d_bn_relu.1} parent=35 // pred_check_branch
          %842 = sbr.rel (%p840) target = $region72
        $region71: #{conv2d_bn_relu.1} parent=35 // pred_region
          %s843 = smul.u32 %s27, %s28
          %s844 = smul.u32 2, %s843
          %s846 = ssub.s32 512, 512
          %847 = vsyncadd %s836, %s846
          %s848 = smul.addr %s844, 2
          %s849 = smul.addr %s848, 128
          %s850 = scalar_lea.hbm %s4, %s849
          %s851 = sshll.u32 %s839, 4
          %s852 = int_to_ptr.vmem [resolvable:$true] %s851
          %857 = dma.vmem_to_hbm [thread:$0]  %s852, 512, %s850, %s836, 256, 256, 16
        $region72: #{conv2d_bn_relu.1} parent=35 // pred_fallthru
          _
      $region36: #{conv2d_bn_relu.1} parent=5 // pred_fallthru
        _
      %p858 = scmp.le.s32.totalorder 2, %s18
      // Predicated region
      $region73: #{conv2d_bn_relu.1} parent=5 // pred_check
        %p859 = pneg %p858
      $region74: #{conv2d_bn_relu.1} parent=5 // pred_check_branch
        %861 = sbr.rel (%p859) target = $region76
      $region75: #{conv2d_bn_relu.1} parent=5 // pred_region
        %s862 = ssub.s32 %s18, 2
        // Predicated region
        $region77: #{conv2d_bn_relu.1} parent=75 // pred_check
          %p863 = pneg %p154
        $region78: #{conv2d_bn_relu.1} parent=75 // pred_check_branch
          %865 = sbr.rel (%p863) target = $region80
        $region79: #{conv2d_bn_relu.1} parent=75 // pred_region
          %s866 = sand.u32 %s139, 1
          %s867 = scalar_lea.sflag [#allocation9], %s866
          %s868 = sand.u32 %s139, 1
          %s869 = smul.addr %s868, 32
          %s870 = scalar_lea.vmem [#allocation15], %s869
          %871 = dma.done %s867, 512
        $region80: #{conv2d_bn_relu.1} parent=75 // pred_fallthru
          _
      $region76: #{conv2d_bn_relu.1} parent=5 // pred_fallthru
        _
    $region6: #{conv2d_bn_relu.1} parent=1 // loop_footer
      %s22 = sadd.s32 1, %s18
    $region7: #{conv2d_bn_relu.1} parent=1 // loop_footer_branch
      %17 = sbr.rel target = $region3
    $region8: #{conv2d_bn_relu.1} parent=1 // loop_exit
      _
    %872 = vsyncpa [#allocation8], 1
    %s873 = scalar_lea.sflag [#allocation8], 1
    %874 = vsyncpa %s873, 1
    %875 = vsyncpa [#allocation11], 1
    %876 = vsyncpa [#allocation14], 1
    %877 = vsyncpa [#allocation9], 1
    %s878 = scalar_lea.sflag [#allocation9], 1
    %879 = vsyncpa %s878, 1

</llo_original>
